<compile_context>
chip_gen: v7x
topology: tpu7x:2x2x1
jax: 0.10.0
libtpu: 0.0.40
codegen_flags: <defaults>
</compile_context>

<pallas_src>
import jax
import jax.numpy as jnp
import numpy as np
from jax.experimental import pallas as pl
from jax.experimental.pallas import tpu as pltpu

NIN = 16
NOUT = 4
NHIDDEN = (64, 64)
BN_EPS = 1e-5
TILE_N = 1024  # rows per grid step (multiple of 8); re-derived smaller for tiny batches


def _round_up(x, m):
    return ((x + m - 1) // m) * m


def mlp_kernel(x_ref, w1_ref, b1_ref, w2_ref, b2_ref, wo_ref, bo_ref, out_ref):
    # BN normalization + affine already folded into (w1, b1) by the wrapper.
    x = x_ref[...]
    h = jnp.dot(x, w1_ref[...], preferred_element_type=jnp.float32) + b1_ref[...]
    h = jnp.maximum(h, 0.0)
    h = jnp.dot(h, w2_ref[...], preferred_element_type=jnp.float32) + b2_ref[...]
    h = jnp.maximum(h, 0.0)
    out = jnp.dot(h, wo_ref[...], preferred_element_type=jnp.float32) + bo_ref[...]
    out_ref[...] = out.astype(out_ref.dtype)


def _resident_spec(a):
    # Built per-argument so the closure captures THIS array's rank (no late binding).
    nd = a.ndim
    return pl.BlockSpec(a.shape, lambda i, _nd=nd: (0,) * _nd)


def mlp_forward(x, params, *, tile_n=TILE_N):
    """x: (N, NIN) float. params: dict of arrays (see init_params). Returns (N, NOUT) f32."""
    n = x.shape[0]
    xf = x.astype(jnp.float32)

    # ---- BatchNorm1d training-mode stats over the FULL batch (outside the tiled kernel) ----
    mean = jnp.mean(xf, axis=0, keepdims=True)                       # (1, NIN)
    var = jnp.mean(jnp.square(xf - mean), axis=0, keepdims=True)     # biased variance
    scale = params["gamma"] * jax.lax.rsqrt(var + BN_EPS)            # (1, NIN)
    shift = params["beta"] - mean * scale                            # (1, NIN)

    # ---- fold BN (normalize + affine) into the first linear layer ----
    w1 = params["w1"] * scale.reshape(-1, 1)                         # (NIN, H0) row-scaled
    b1 = shift @ params["w1"] + params["b1"]                         # (1, H0)

    # ---- batch tiling ----
    tile_n = min(tile_n, _round_up(n, 8))
    n_pad = _round_up(n, tile_n)
    if n_pad != n:
        xf = jnp.pad(xf, ((0, n_pad - n), (0, 0)))
    grid = (n_pad // tile_n,)

    weights = (w1, b1, params["w2"], params["b2"], params["wo"], params["bo"])
    in_specs = [pl.BlockSpec((tile_n, NIN), lambda i: (i, 0))] + [
        _resident_spec(w) for w in weights
    ]
    out_spec = pl.BlockSpec((tile_n, NOUT), lambda i: (i, 0))

    out = pl.pallas_call(
        mlp_kernel,
        out_shape=jax.ShapeDtypeStruct((n_pad, NOUT), jnp.float32),
        grid=grid,
        in_specs=in_specs,
        out_specs=out_spec,
        compiler_params=pltpu.CompilerParams(
            dimension_semantics=("parallel",),
            vmem_limit_bytes=32 * 1024 * 1024,
        ),
    )(xf, *weights)
    return out[:n]


# ----------------------------- init (matches PyTorch defaults) -----------------------------

def xavier_uniform(key, fan_in, fan_out, gain):
    # PyTorch xavier_uniform_: bound = gain * sqrt(6 / (fan_in + fan_out)); stored (in, out).
    bound = gain * np.sqrt(6.0 / (fan_in + fan_out))
    return jax.random.uniform(key, (fan_in, fan_out), jnp.float32, -bound, bound)


def linear_bias(key, fan_in, fan_out):
    # PyTorch nn.Linear default bias init: U(-1/sqrt(fan_in), 1/sqrt(fan_in))
    bound = 1.0 / np.sqrt(fan_in)
    return jax.random.uniform(key, (1, fan_out), jnp.float32, -bound, bound)


def init_params(key):
    gain = np.sqrt(2.0)  # nn.init.calculate_gain('relu')
    k = jax.random.split(key, 6)
    return {
        "gamma": jnp.ones((1, NIN), jnp.float32),   # BatchNorm1d affine defaults
        "beta": jnp.zeros((1, NIN), jnp.float32),
        "w1": xavier_uniform(k[0], NIN, NHIDDEN[0], gain),
        "b1": linear_bias(k[1], NIN, NHIDDEN[0]),
        "w2": xavier_uniform(k[2], NHIDDEN[0], NHIDDEN[1], gain),
        "b2": linear_bias(k[3], NHIDDEN[0], NHIDDEN[1]),
        "wo": xavier_uniform(k[4], NHIDDEN[1], NOUT, gain),
        "bo": linear_bias(k[5], NHIDDEN[1], NOUT),
    }


# ----------------------------- pure-JAX reference (faithful to PyTorch) ---------------------

def mlp_reference(x, p):
    mean = jnp.mean(x, axis=0, keepdims=True)
    var = jnp.mean((x - mean) ** 2, axis=0, keepdims=True)
    xn = (x - mean) / jnp.sqrt(var + BN_EPS) * p["gamma"] + p["beta"]
    h = jnp.maximum(xn @ p["w1"] + p["b1"], 0.0)
    h = jnp.maximum(h @ p["w2"] + p["b2"], 0.0)
    return h @ p["wo"] + p["bo"]


if __name__ == "__main__":
    key = jax.random.PRNGKey(0)
    kx, kp = jax.random.split(key)
    params = init_params(kp)

    # Small single-tile case.
    N = 64
    x = jax.random.normal(kx, (N, NIN), jnp.float32)
    out = jax.block_until_ready(mlp_forward(x, params))
    ref = mlp_reference(x, params)
    np.testing.assert_allclose(np.asarray(out), np.asarray(ref), rtol=1e-4, atol=1e-5)

    # Multi-tile + padding case (N not a multiple of the tile) to exercise the batch grid.
    N2 = 200
    x2 = jax.random.normal(jax.random.PRNGKey(1), (N2, NIN), jnp.float32)
    out2 = jax.block_until_ready(mlp_forward(x2, params, tile_n=64))
    ref2 = mlp_reference(x2, params)
    np.testing.assert_allclose(np.asarray(out2), np.asarray(ref2), rtol=1e-4, atol=1e-5)

    print("KERNEL_OK")
</pallas_src>

<mosaic_0001>
module attributes {stable_mosaic.version = 11 : i64} {
  func.func @mlp_kernel(%arg0: i32, %arg1: memref<64x16xf32, #tpu.memory_space<vmem>>, %arg2: memref<16x64xf32, #tpu.memory_space<vmem>>, %arg3: memref<1x64xf32, #tpu.memory_space<vmem>>, %arg4: memref<64x64xf32, #tpu.memory_space<vmem>>, %arg5: memref<1x64xf32, #tpu.memory_space<vmem>>, %arg6: memref<64x4xf32, #tpu.memory_space<vmem>>, %arg7: memref<1x4xf32, #tpu.memory_space<vmem>>, %arg8: memref<64x4xf32, #tpu.memory_space<vmem>>) attributes {dimension_semantics = [#tpu.dimension_semantics<parallel>], iteration_bounds = array<i64: 1>, scalar_prefetch = 0 : i64, scratch_operands = 0 : i64, tpu.core_type = #tpu.core_type<tc>, window_params = [{transform_indices = @transform_0, window_bounds = array<i64: 64, 16>}, {pipeline_mode = #tpu.pipeline_mode<synchronous>, transform_indices = @transform_1, window_bounds = array<i64: 16, 64>}, {pipeline_mode = #tpu.pipeline_mode<synchronous>, transform_indices = @transform_2, window_bounds = array<i64: 1, 64>}, {pipeline_mode = #tpu.pipeline_mode<synchronous>, transform_indices = @transform_3, window_bounds = array<i64: 64, 64>}, {pipeline_mode = #tpu.pipeline_mode<synchronous>, transform_indices = @transform_4, window_bounds = array<i64: 1, 64>}, {pipeline_mode = #tpu.pipeline_mode<synchronous>, transform_indices = @transform_5, window_bounds = array<i64: 64, 4>}, {pipeline_mode = #tpu.pipeline_mode<synchronous>, transform_indices = @transform_6, window_bounds = array<i64: 1, 4>}, {transform_indices = @transform_7, window_bounds = array<i64: 64, 4>}]} {
    %c0 = arith.constant 0 : index
    %c0_0 = arith.constant 0 : index
    %0 = vector.load %arg1[%c0, %c0_0] : memref<64x16xf32, #tpu.memory_space<vmem>>, vector<64x16xf32>
    %c0_1 = arith.constant 0 : index
    %c0_2 = arith.constant 0 : index
    %1 = vector.load %arg2[%c0_1, %c0_2] : memref<16x64xf32, #tpu.memory_space<vmem>>, vector<16x64xf32>
    %cst = arith.constant dense<0.000000e+00> : vector<64x64xf32>
    %2 = tpu.matmul %0, %1, %cst {dimension_numbers = #tpu.dot_dimension_numbers<[1], [0], [0], [1], [0, 0, 1, 1], [], []>} : vector<64x16xf32>, vector<16x64xf32>, vector<64x64xf32> -> vector<64x64xf32>
    %c0_3 = arith.constant 0 : index
    %c0_4 = arith.constant 0 : index
    %3 = vector.load %arg3[%c0_3, %c0_4] : memref<1x64xf32, #tpu.memory_space<vmem>>, vector<1x64xf32>
    %4 = vector.broadcast %3 : vector<1x64xf32> to vector<64x64xf32>
    %5 = arith.addf %2, %4 : vector<64x64xf32>
    %cst_5 = arith.constant 0.000000e+00 : f32
    %6 = vector.broadcast %cst_5 : f32 to vector<64x64xf32>
    %7 = arith.maximumf %5, %6 : vector<64x64xf32>
    %c0_6 = arith.constant 0 : index
    %c0_7 = arith.constant 0 : index
    %8 = vector.load %arg4[%c0_6, %c0_7] : memref<64x64xf32, #tpu.memory_space<vmem>>, vector<64x64xf32>
    %cst_8 = arith.constant dense<0.000000e+00> : vector<64x64xf32>
    %9 = tpu.matmul %7, %8, %cst_8 {dimension_numbers = #tpu.dot_dimension_numbers<[1], [0], [0], [1], [0, 0, 1, 1], [], []>} : vector<64x64xf32>, vector<64x64xf32>, vector<64x64xf32> -> vector<64x64xf32>
    %c0_9 = arith.constant 0 : index
    %c0_10 = arith.constant 0 : index
    %10 = vector.load %arg5[%c0_9, %c0_10] : memref<1x64xf32, #tpu.memory_space<vmem>>, vector<1x64xf32>
    %11 = vector.broadcast %10 : vector<1x64xf32> to vector<64x64xf32>
    %12 = arith.addf %9, %11 : vector<64x64xf32>
    %cst_11 = arith.constant 0.000000e+00 : f32
    %13 = vector.broadcast %cst_11 : f32 to vector<64x64xf32>
    %14 = arith.maximumf %12, %13 : vector<64x64xf32>
    %c0_12 = arith.constant 0 : index
    %c0_13 = arith.constant 0 : index
    %15 = vector.load %arg6[%c0_12, %c0_13] : memref<64x4xf32, #tpu.memory_space<vmem>>, vector<64x4xf32>
    %cst_14 = arith.constant dense<0.000000e+00> : vector<64x4xf32>
    %16 = tpu.matmul %14, %15, %cst_14 {dimension_numbers = #tpu.dot_dimension_numbers<[1], [0], [0], [1], [0, 0, 1, 1], [], []>} : vector<64x64xf32>, vector<64x4xf32>, vector<64x4xf32> -> vector<64x4xf32>
    %c0_15 = arith.constant 0 : index
    %c0_16 = arith.constant 0 : index
    %17 = vector.load %arg7[%c0_15, %c0_16] : memref<1x4xf32, #tpu.memory_space<vmem>>, vector<1x4xf32>
    %18 = vector.broadcast %17 : vector<1x4xf32> to vector<64x4xf32>
    %19 = arith.addf %16, %18 : vector<64x4xf32>
    %c0_17 = arith.constant 0 : index
    %c0_18 = arith.constant 0 : index
    %20 = vector.load %arg8[%c0_17, %c0_18] : memref<64x4xf32, #tpu.memory_space<vmem>>, vector<64x4xf32>
    tpu.vector_store %arg8[%c0_17, %c0_18], %19 {strides = array<i32>} : memref<64x4xf32, #tpu.memory_space<vmem>>, vector<64x4xf32>,
    return
  }
  func.func @transform_0(%arg0: i32) -> (i32, i32) {
    %c0_i32 = arith.constant 0 : i32
    %c0_i32_0 = arith.constant 0 : i32
    return %arg0, %c0_i32 : i32, i32
  }
  func.func @transform_1(%arg0: i32) -> (i32, i32) {
    %c0_i32 = arith.constant 0 : i32
    %c0_i32_0 = arith.constant 0 : i32
    %c0_i32_1 = arith.constant 0 : i32
    return %c0_i32, %c0_i32_0 : i32, i32
  }
  func.func @transform_2(%arg0: i32) -> (i32, i32) {
    %c0_i32 = arith.constant 0 : i32
    %c0_i32_0 = arith.constant 0 : i32
    %c0_i32_1 = arith.constant 0 : i32
    return %c0_i32, %c0_i32_0 : i32, i32
  }
  func.func @transform_3(%arg0: i32) -> (i32, i32) {
    %c0_i32 = arith.constant 0 : i32
    %c0_i32_0 = arith.constant 0 : i32
    %c0_i32_1 = arith.constant 0 : i32
    return %c0_i32, %c0_i32_0 : i32, i32
  }
  func.func @transform_4(%arg0: i32) -> (i32, i32) {
    %c0_i32 = arith.constant 0 : i32
    %c0_i32_0 = arith.constant 0 : i32
    %c0_i32_1 = arith.constant 0 : i32
    return %c0_i32, %c0_i32_0 : i32, i32
  }
  func.func @transform_5(%arg0: i32) -> (i32, i32) {
    %c0_i32 = arith.constant 0 : i32
    %c0_i32_0 = arith.constant 0 : i32
    %c0_i32_1 = arith.constant 0 : i32
    return %c0_i32, %c0_i32_0 : i32, i32
  }
  func.func @transform_6(%arg0: i32) -> (i32, i32) {
    %c0_i32 = arith.constant 0 : i32
    %c0_i32_0 = arith.constant 0 : i32
    %c0_i32_1 = arith.constant 0 : i32
    return %c0_i32, %c0_i32_0 : i32, i32
  }
  func.func @transform_7(%arg0: i32) -> (i32, i32) {
    %c0_i32 = arith.constant 0 : i32
    %c0_i32_0 = arith.constant 0 : i32
    return %arg0, %c0_i32 : i32, i32
  }
}

</mosaic_0001>

<llo_original>
// kernel: tpu_custom_call.1
$region0: #{tpu_custom_call.1}
  #allocation0 [shape = 'u32[]', space=smem, size = 0x4, offset = 0x4, fixed_abs, tag = 'smem constant byte address 0x4 - core index']
  #allocation1 [shape = 'u32[144,128]{1,0:T(1,128)}', space=vmem, size = 0x12000, scoped, tag = 'internal scratch']
  %s0 = inlined_call_operand.vmem [shape: f32[64,16], index: 0, kind: input, shape index: {}]
  %s1 = inlined_call_operand.vmem [shape: f32[16,64], index: 1, kind: input, shape index: {}]
  %s2 = inlined_call_operand.vmem [shape: f32[1,64], index: 2, kind: input, shape index: {}]
  %s3 = inlined_call_operand.vmem [shape: f32[64,64], index: 3, kind: input, shape index: {}]
  %s4 = inlined_call_operand.vmem [shape: f32[1,64], index: 4, kind: input, shape index: {}]
  %s5 = inlined_call_operand.vmem [shape: f32[64,4], index: 5, kind: input, shape index: {}]
  %s6 = inlined_call_operand.vmem [shape: f32[1,4], index: 6, kind: input, shape index: {}]
  %s7 = inlined_call_operand.vmem [shape: f32[64,4], index: 7, kind: output, shape index: {}]
  %s8 = sld [smem:[#allocation0]]
  $region38: #{tpu_custom_call.1} parent=0
    _
  %s10 = ssub.s32 1, %s8
  %s11 = scalar_select 0, %s10, %s8
  // Predicated region
  $region2: #{tpu_custom_call.1} parent=0 // pred_check
    _
  $region3: #{tpu_custom_call.1} parent=0 // pred_check_branch
    %13 = sbr.rel (0) target = $region5
  $region4: #{tpu_custom_call.1} parent=0 // pred_region
    _
  $region5: #{tpu_custom_call.1} parent=0 // pred_fallthru
    _
  // Predicated region
  $region6: #{tpu_custom_call.1} parent=0 // pred_check
    _
  $region7: #{tpu_custom_call.1} parent=0 // pred_check_branch
    %15 = sbr.rel (0) target = $region9
  $region8: #{tpu_custom_call.1} parent=0 // pred_region
    _
  $region9: #{tpu_custom_call.1} parent=0 // pred_fallthru
    _
  // Predicated region
  $region10: #{tpu_custom_call.1} parent=0 // pred_check
    _
  $region11: #{tpu_custom_call.1} parent=0 // pred_check_branch
    %17 = sbr.rel (0) target = $region13
  $region12: #{tpu_custom_call.1} parent=0 // pred_region
    _
  $region13: #{tpu_custom_call.1} parent=0 // pred_fallthru
    _
  // Predicated region
  $region14: #{tpu_custom_call.1} parent=0 // pred_check
    _
  $region15: #{tpu_custom_call.1} parent=0 // pred_check_branch
    %19 = sbr.rel (0) target = $region17
  $region16: #{tpu_custom_call.1} parent=0 // pred_region
    _
  $region17: #{tpu_custom_call.1} parent=0 // pred_fallthru
    _
  // Predicated region
  $region18: #{tpu_custom_call.1} parent=0 // pred_check
    _
  $region19: #{tpu_custom_call.1} parent=0 // pred_check_branch
    %21 = sbr.rel (0) target = $region21
  $region20: #{tpu_custom_call.1} parent=0 // pred_region
    _
  $region21: #{tpu_custom_call.1} parent=0 // pred_fallthru
    _
  // Predicated region
  $region22: #{tpu_custom_call.1} parent=0 // pred_check
    _
  $region23: #{tpu_custom_call.1} parent=0 // pred_check_branch
    %23 = sbr.rel (0) target = $region25
  $region24: #{tpu_custom_call.1} parent=0 // pred_region
    _
  $region25: #{tpu_custom_call.1} parent=0 // pred_fallthru
    _
  // Predicated region
  $region26: #{tpu_custom_call.1} parent=0 // pred_check
    _
  $region27: #{tpu_custom_call.1} parent=0 // pred_check_branch
    %25 = sbr.rel (0) target = $region29
  $region28: #{tpu_custom_call.1} parent=0 // pred_region
    _
  $region29: #{tpu_custom_call.1} parent=0 // pred_fallthru
    _
  %v26 = vld [vmem:[%s0] sm:$0xff]
  %v27 = vld [vmem:[%s0 + $0x8] sm:$0xff]
  %v28 = vld [vmem:[%s0 + $0x10] sm:$0xff]
  %v29 = vld [vmem:[%s0 + $0x18] sm:$0xff]
  %v30 = vld [vmem:[%s0 + $0x20] sm:$0xff]
  %v31 = vld [vmem:[%s0 + $0x28] sm:$0xff]
  %v32 = vld [vmem:[%s0 + $0x30] sm:$0xff]
  %v33 = vld [vmem:[%s0 + $0x38] sm:$0xff]
  %v34 = vld [vmem:[%s1] sm:$0xff]
  %v35 = vld [vmem:[%s1 + $0x8] sm:$0xff]
  %v36 = vld [vmem:[%s2] sm:$0x1]
  %v38 = vlaneseq
  %v39 = vshrl.u32 %v38, 7
  %v40 = vsub.s32 0, %v39
  %v41 = vrot.slane %v36, %v40
  %vm43 = vcmask 130048
  %v45 = vsel %vm43, %v26, 0
  %v48 = vsel %vm43, %v27, 0
  %v51 = vsel %vm43, %v28, 0
  %v54 = vsel %vm43, %v29, 0
  %v57 = vsel %vm43, %v30, 0
  %v60 = vsel %vm43, %v31, 0
  %v63 = vsel %vm43, %v32, 0
  %v66 = vsel %vm43, %v33, 0
  %68 = vmatprep.subr.mxu0 0.0
  %69 = vmatpush1.msra.mxu0 %v34
  %70 = vmatprep.subr.mxu0 0.0
  %71 = vmatpush1.msra.mxu0 %v35
  %72 = vmatprep.subr.mxu0 0.0
  %73 = vmatpush1.msra.mxu0 0.0
  %74 = vmatprep.subr.mxu0 0.0
  %75 = vmatpush1.msra.mxu0 0.0
  %76 = vmatprep.subr.mxu0 0.0
  %77 = vmatpush1.msra.mxu0 0.0
  %78 = vmatprep.subr.mxu0 0.0
  %79 = vmatpush1.msra.mxu0 0.0
  %80 = vmatprep.subr.mxu0 0.0
  %81 = vmatpush1.msra.mxu0 0.0
  %82 = vmatprep.subr.mxu0 0.0
  %83 = vmatpush1.msra.mxu0 0.0
  %84 = vmatprep.subr.mxu0 0.0
  %85 = vmatpush1.msra.mxu0 0.0
  %86 = vmatprep.subr.mxu0 0.0
  %87 = vmatpush1.msra.mxu0 0.0
  %88 = vmatprep.subr.mxu0 0.0
  %89 = vmatpush1.msra.mxu0 0.0
  %90 = vmatprep.subr.mxu0 0.0
  %91 = vmatpush1.msra.mxu0 0.0
  %92 = vmatprep.subr.mxu0 0.0
  %93 = vmatpush1.msra.mxu0 0.0
  %94 = vmatprep.subr.mxu0 0.0
  %95 = vmatpush1.msra.mxu0 0.0
  %96 = vmatprep.subr.mxu0 0.0
  %97 = vmatpush1.msra.mxu0 0.0
  %98 = vmatprep.subr.mxu0 0.0
  %99 = vmatpush1.msra.mxu0 0.0
  %100 = vmatprep.subr.mxu0 0.0
  %101 = vmatpush1.msra.mxu0 0.0
  %102 = vmatprep.subr.mxu0 0.0
  %103 = vmatpush1.msra.mxu0 0.0
  %104 = vmatprep.subr.mxu0 0.0
  %105 = vmatpush1.msra.mxu0 0.0
  %106 = vmatprep.subr.mxu0 0.0
  %107 = vmatpush1.msra.mxu0 0.0
  %108 = vmatprep.subr.mxu0 0.0
  %109 = vmatpush1.msra.mxu0 0.0
  %110 = vmatprep.subr.mxu0 0.0
  %111 = vmatpush1.msra.mxu0 0.0
  %112 = vmatprep.subr.mxu0 0.0
  %113 = vmatpush1.msra.mxu0 0.0
  %114 = vmatprep.subr.mxu0 0.0
  %115 = vmatpush1.msra.mxu0 0.0
  %116 = vmatprep.subr.mxu0 0.0
  %117 = vmatpush1.msra.mxu0 0.0
  %118 = vmatprep.subr.mxu0 0.0
  %119 = vmatpush1.msra.mxu0 0.0
  %120 = vmatprep.subr.mxu0 0.0
  %121 = vmatpush1.msra.mxu0 0.0
  %122 = vmatprep.subr.mxu0 0.0
  %123 = vmatpush1.msra.mxu0 0.0
  %124 = vmatprep.subr.mxu0 0.0
  %125 = vmatpush1.msra.mxu0 0.0
  %126 = vmatprep.subr.mxu0 0.0
  %127 = vmatpush1.msra.mxu0 0.0
  %128 = vmatprep.subr.mxu0 0.0
  %129 = vmatpush1.msra.mxu0 0.0
  %130 = vmatprep.subr.mxu0 0.0
  %131 = vmatpush1.msra.mxu0 0.0
  %132 = vmatprep.mubr.f32.mxu0 0.0
  %133 = vmatmul.mubr.f32.gmra.mrb[0].mxu0 %v45
  %v134 = vpop.f32.mrb[0].mxu0
  %v135 = vadd.f32 %v41, %v134
  %v136 = vpop.f32.mrb[0].mxu0
  %137 = vmatprep.mubr.f32.mxu0 0.0
  %138 = vmatmul.mubr.f32.gmra.mrb[0].mxu0 %v48
  %v139 = vpop.f32.mrb[0].mxu0
  %v140 = vadd.f32 %v41, %v139
  %v141 = vpop.f32.mrb[0].mxu0
  %142 = vmatprep.mubr.f32.mxu0 0.0
  %143 = vmatmul.mubr.f32.gmra.mrb[0].mxu0 %v51
  %v144 = vpop.f32.mrb[0].mxu0
  %v145 = vadd.f32 %v41, %v144
  %v146 = vpop.f32.mrb[0].mxu0
  %147 = vmatprep.mubr.f32.mxu0 0.0
  %148 = vmatmul.mubr.f32.gmra.mrb[0].mxu0 %v54
  %v149 = vpop.f32.mrb[0].mxu0
  %v150 = vadd.f32 %v41, %v149
  %v151 = vpop.f32.mrb[0].mxu0
  %152 = vmatprep.mubr.f32.mxu0 0.0
  %153 = vmatmul.mubr.f32.gmra.mrb[0].mxu0 %v57
  %v154 = vpop.f32.mrb[0].mxu0
  %v155 = vadd.f32 %v41, %v154
  %v156 = vpop.f32.mrb[0].mxu0
  %157 = vmatprep.mubr.f32.mxu0 0.0
  %158 = vmatmul.mubr.f32.gmra.mrb[0].mxu0 %v60
  %v159 = vpop.f32.mrb[0].mxu0
  %v160 = vadd.f32 %v41, %v159
  %v161 = vpop.f32.mrb[0].mxu0
  %162 = vmatprep.mubr.f32.mxu0 0.0
  %163 = vmatmul.mubr.f32.gmra.mrb[0].mxu0 %v63
  %v164 = vpop.f32.mrb[0].mxu0
  %v165 = vadd.f32 %v41, %v164
  %v166 = vpop.f32.mrb[0].mxu0
  %167 = vmatprep.mubr.f32.mxu0 0.0
  %168 = vmatmul.mubr.f32.gmra.mrb[0].mxu0 %v66
  %v169 = vpop.f32.mrb[0].mxu0
  %v170 = vadd.f32 %v41, %v169
  %v171 = vpop.f32.mrb[0].mxu0
  %172 = vdwg.mxu0
  %v173 = vmax.f32 %v135, 0.0
  %v174 = vmax.f32 %v140, 0.0
  %v175 = vmax.f32 %v145, 0.0
  %v176 = vmax.f32 %v150, 0.0
  %v177 = vmax.f32 %v155, 0.0
  %v178 = vmax.f32 %v160, 0.0
  %v179 = vmax.f32 %v165, 0.0
  %v180 = vmax.f32 %v170, 0.0
  %v181 = vld [vmem:[%s3] sm:$0xff]
  %v182 = vld [vmem:[%s3 + $0x8] sm:$0xff]
  %v183 = vld [vmem:[%s3 + $0x10] sm:$0xff]
  %v184 = vld [vmem:[%s3 + $0x18] sm:$0xff]
  %v185 = vld [vmem:[%s3 + $0x20] sm:$0xff]
  %v186 = vld [vmem:[%s3 + $0x28] sm:$0xff]
  %v187 = vld [vmem:[%s3 + $0x30] sm:$0xff]
  %v188 = vld [vmem:[%s3 + $0x38] sm:$0xff]
  %v189 = vld [vmem:[%s4] sm:$0x1]
  %v191 = vlaneseq
  %v192 = vshrl.u32 %v191, 7
  %v193 = vsub.s32 0, %v192
  %v194 = vrot.slane %v189, %v193
  %vm196 = vcmask 523264
  %v198 = vsel %vm196, %v173, 0
  %v201 = vsel %vm196, %v174, 0
  %v204 = vsel %vm196, %v175, 0
  %v207 = vsel %vm196, %v176, 0
  %v210 = vsel %vm196, %v177, 0
  %v213 = vsel %vm196, %v178, 0
  %v216 = vsel %vm196, %v179, 0
  %v219 = vsel %vm196, %v180, 0
  %221 = vmatprep.subr.mxu0 0.0
  %222 = vmatpush1.msra.mxu0 %v181
  %223 = vmatprep.subr.mxu0 0.0
  %224 = vmatpush1.msra.mxu0 %v182
  %225 = vmatprep.subr.mxu0 0.0
  %226 = vmatpush1.msra.mxu0 %v183
  %227 = vmatprep.subr.mxu0 0.0
  %228 = vmatpush1.msra.mxu0 %v184
  %229 = vmatprep.subr.mxu0 0.0
  %230 = vmatpush1.msra.mxu0 %v185
  %231 = vmatprep.subr.mxu0 0.0
  %232 = vmatpush1.msra.mxu0 %v186
  %233 = vmatprep.subr.mxu0 0.0
  %234 = vmatpush1.msra.mxu0 %v187
  %235 = vmatprep.subr.mxu0 0.0
  %236 = vmatpush1.msra.mxu0 %v188
  %237 = vmatprep.subr.mxu0 0.0
  %238 = vmatpush1.msra.mxu0 0.0
  %239 = vmatprep.subr.mxu0 0.0
  %240 = vmatpush1.msra.mxu0 0.0
  %241 = vmatprep.subr.mxu0 0.0
  %242 = vmatpush1.msra.mxu0 0.0
  %243 = vmatprep.subr.mxu0 0.0
  %244 = vmatpush1.msra.mxu0 0.0
  %245 = vmatprep.subr.mxu0 0.0
  %246 = vmatpush1.msra.mxu0 0.0
  %247 = vmatprep.subr.mxu0 0.0
  %248 = vmatpush1.msra.mxu0 0.0
  %249 = vmatprep.subr.mxu0 0.0
  %250 = vmatpush1.msra.mxu0 0.0
  %251 = vmatprep.subr.mxu0 0.0
  %252 = vmatpush1.msra.mxu0 0.0
  %253 = vmatprep.subr.mxu0 0.0
  %254 = vmatpush1.msra.mxu0 0.0
  %255 = vmatprep.subr.mxu0 0.0
  %256 = vmatpush1.msra.mxu0 0.0
  %257 = vmatprep.subr.mxu0 0.0
  %258 = vmatpush1.msra.mxu0 0.0
  %259 = vmatprep.subr.mxu0 0.0
  %260 = vmatpush1.msra.mxu0 0.0
  %261 = vmatprep.subr.mxu0 0.0
  %262 = vmatpush1.msra.mxu0 0.0
  %263 = vmatprep.subr.mxu0 0.0
  %264 = vmatpush1.msra.mxu0 0.0
  %265 = vmatprep.subr.mxu0 0.0
  %266 = vmatpush1.msra.mxu0 0.0
  %267 = vmatprep.subr.mxu0 0.0
  %268 = vmatpush1.msra.mxu0 0.0
  %269 = vmatprep.subr.mxu0 0.0
  %270 = vmatpush1.msra.mxu0 0.0
  %271 = vmatprep.subr.mxu0 0.0
  %272 = vmatpush1.msra.mxu0 0.0
  %273 = vmatprep.subr.mxu0 0.0
  %274 = vmatpush1.msra.mxu0 0.0
  %275 = vmatprep.subr.mxu0 0.0
  %276 = vmatpush1.msra.mxu0 0.0
  %277 = vmatprep.subr.mxu0 0.0
  %278 = vmatpush1.msra.mxu0 0.0
  %279 = vmatprep.subr.mxu0 0.0
  %280 = vmatpush1.msra.mxu0 0.0
  %281 = vmatprep.subr.mxu0 0.0
  %282 = vmatpush1.msra.mxu0 0.0
  %283 = vmatprep.subr.mxu0 0.0
  %284 = vmatpush1.msra.mxu0 0.0
  %285 = vmatprep.mubr.f32.mxu0 0.0
  %286 = vmatmul.mubr.f32.gmra.mrb[0].mxu0 %v198
  %v287 = vpop.f32.mrb[0].mxu0
  %v288 = vadd.f32 %v194, %v287
  %v289 = vpop.f32.mrb[0].mxu0
  %290 = vmatprep.mubr.f32.mxu0 0.0
  %291 = vmatmul.mubr.f32.gmra.mrb[0].mxu0 %v201
  %v292 = vpop.f32.mrb[0].mxu0
  %v293 = vadd.f32 %v194, %v292
  %v294 = vpop.f32.mrb[0].mxu0
  %295 = vmatprep.mubr.f32.mxu0 0.0
  %296 = vmatmul.mubr.f32.gmra.mrb[0].mxu0 %v204
  %v297 = vpop.f32.mrb[0].mxu0
  %v298 = vadd.f32 %v194, %v297
  %v299 = vpop.f32.mrb[0].mxu0
  %300 = vmatprep.mubr.f32.mxu0 0.0
  %301 = vmatmul.mubr.f32.gmra.mrb[0].mxu0 %v207
  %v302 = vpop.f32.mrb[0].mxu0
  %v303 = vadd.f32 %v194, %v302
  %v304 = vpop.f32.mrb[0].mxu0
  %305 = vmatprep.mubr.f32.mxu0 0.0
  %306 = vmatmul.mubr.f32.gmra.mrb[0].mxu0 %v210
  %v307 = vpop.f32.mrb[0].mxu0
  %v308 = vadd.f32 %v194, %v307
  %v309 = vpop.f32.mrb[0].mxu0
  %310 = vmatprep.mubr.f32.mxu0 0.0
  %311 = vmatmul.mubr.f32.gmra.mrb[0].mxu0 %v213
  %v312 = vpop.f32.mrb[0].mxu0
  %v313 = vadd.f32 %v194, %v312
  %v314 = vpop.f32.mrb[0].mxu0
  %315 = vmatprep.mubr.f32.mxu0 0.0
  %316 = vmatmul.mubr.f32.gmra.mrb[0].mxu0 %v216
  %v317 = vpop.f32.mrb[0].mxu0
  %v318 = vadd.f32 %v194, %v317
  %v319 = vpop.f32.mrb[0].mxu0
  %320 = vmatprep.mubr.f32.mxu0 0.0
  %321 = vmatmul.mubr.f32.gmra.mrb[0].mxu0 %v219
  %v322 = vpop.f32.mrb[0].mxu0
  %v323 = vadd.f32 %v194, %v322
  %v324 = vpop.f32.mrb[0].mxu0
  %325 = vdwg.mxu0
  %v326 = vmax.f32 %v288, 0.0
  %v327 = vmax.f32 %v293, 0.0
  %v328 = vmax.f32 %v298, 0.0
  %v329 = vmax.f32 %v303, 0.0
  %v330 = vmax.f32 %v308, 0.0
  %v331 = vmax.f32 %v313, 0.0
  %v332 = vmax.f32 %v318, 0.0
  %v333 = vmax.f32 %v323, 0.0
  %v334 = vld [vmem:[%s5] sm:$0xff]
  %v335 = vld [vmem:[%s5 + $0x8] sm:$0xff]
  %v336 = vld [vmem:[%s5 + $0x10] sm:$0xff]
  %v337 = vld [vmem:[%s5 + $0x18] sm:$0xff]
  %v338 = vld [vmem:[%s5 + $0x20] sm:$0xff]
  %v339 = vld [vmem:[%s5 + $0x28] sm:$0xff]
  %v340 = vld [vmem:[%s5 + $0x30] sm:$0xff]
  %v341 = vld [vmem:[%s5 + $0x38] sm:$0xff]
  %v342 = vld [vmem:[%s6] sm:$0x1]
  %v344 = vlaneseq
  %v345 = vshrl.u32 %v344, 7
  %v346 = vsub.s32 0, %v345
  %v347 = vrot.slane %v342, %v346
  %v350 = vsel %vm196, %v326, 0
  %v353 = vsel %vm196, %v327, 0
  %v356 = vsel %vm196, %v328, 0
  %v359 = vsel %vm196, %v329, 0
  %v362 = vsel %vm196, %v330, 0
  %v365 = vsel %vm196, %v331, 0
  %v368 = vsel %vm196, %v332, 0
  %v371 = vsel %vm196, %v333, 0
  %373 = vmatprep.subr.mxu0 0.0
  %374 = vmatpush1.msra.mxu0 %v334
  %375 = vmatprep.subr.mxu0 0.0
  %376 = vmatpush1.msra.mxu0 %v335
  %377 = vmatprep.subr.mxu0 0.0
  %378 = vmatpush1.msra.mxu0 %v336
  %379 = vmatprep.subr.mxu0 0.0
  %380 = vmatpush1.msra.mxu0 %v337
  %381 = vmatprep.subr.mxu0 0.0
  %382 = vmatpush1.msra.mxu0 %v338
  %383 = vmatprep.subr.mxu0 0.0
  %384 = vmatpush1.msra.mxu0 %v339
  %385 = vmatprep.subr.mxu0 0.0
  %386 = vmatpush1.msra.mxu0 %v340
  %387 = vmatprep.subr.mxu0 0.0
  %388 = vmatpush1.msra.mxu0 %v341
  %389 = vmatprep.subr.mxu0 0.0
  %390 = vmatpush1.msra.mxu0 0.0
  %391 = vmatprep.subr.mxu0 0.0
  %392 = vmatpush1.msra.mxu0 0.0
  %393 = vmatprep.subr.mxu0 0.0
  %394 = vmatpush1.msra.mxu0 0.0
  %395 = vmatprep.subr.mxu0 0.0
  %396 = vmatpush1.msra.mxu0 0.0
  %397 = vmatprep.subr.mxu0 0.0
  %398 = vmatpush1.msra.mxu0 0.0
  %399 = vmatprep.subr.mxu0 0.0
  %400 = vmatpush1.msra.mxu0 0.0
  %401 = vmatprep.subr.mxu0 0.0
  %402 = vmatpush1.msra.mxu0 0.0
  %403 = vmatprep.subr.mxu0 0.0
  %404 = vmatpush1.msra.mxu0 0.0
  %405 = vmatprep.subr.mxu0 0.0
  %406 = vmatpush1.msra.mxu0 0.0
  %407 = vmatprep.subr.mxu0 0.0
  %408 = vmatpush1.msra.mxu0 0.0
  %409 = vmatprep.subr.mxu0 0.0
  %410 = vmatpush1.msra.mxu0 0.0
  %411 = vmatprep.subr.mxu0 0.0
  %412 = vmatpush1.msra.mxu0 0.0
  %413 = vmatprep.subr.mxu0 0.0
  %414 = vmatpush1.msra.mxu0 0.0
  %415 = vmatprep.subr.mxu0 0.0
  %416 = vmatpush1.msra.mxu0 0.0
  %417 = vmatprep.subr.mxu0 0.0
  %418 = vmatpush1.msra.mxu0 0.0
  %419 = vmatprep.subr.mxu0 0.0
  %420 = vmatpush1.msra.mxu0 0.0
  %421 = vmatprep.subr.mxu0 0.0
  %422 = vmatpush1.msra.mxu0 0.0
  %423 = vmatprep.subr.mxu0 0.0
  %424 = vmatpush1.msra.mxu0 0.0
  %425 = vmatprep.subr.mxu0 0.0
  %426 = vmatpush1.msra.mxu0 0.0
  %427 = vmatprep.subr.mxu0 0.0
  %428 = vmatpush1.msra.mxu0 0.0
  %429 = vmatprep.subr.mxu0 0.0
  %430 = vmatpush1.msra.mxu0 0.0
  %431 = vmatprep.subr.mxu0 0.0
  %432 = vmatpush1.msra.mxu0 0.0
  %433 = vmatprep.subr.mxu0 0.0
  %434 = vmatpush1.msra.mxu0 0.0
  %435 = vmatprep.subr.mxu0 0.0
  %436 = vmatpush1.msra.mxu0 0.0
  %437 = vmatprep.mubr.f32.mxu0 0.0
  %438 = vmatmul.mubr.f32.gmra.mrb[0].mxu0 %v350
  %v439 = vpop.f32.mrb[0].mxu0
  %v440 = vadd.f32 %v347, %v439
  %v441 = vpop.f32.mrb[0].mxu0
  %442 = vmatprep.mubr.f32.mxu0 0.0
  %443 = vmatmul.mubr.f32.gmra.mrb[0].mxu0 %v353
  %v444 = vpop.f32.mrb[0].mxu0
  %v445 = vadd.f32 %v347, %v444
  %v446 = vpop.f32.mrb[0].mxu0
  %447 = vmatprep.mubr.f32.mxu0 0.0
  %448 = vmatmul.mubr.f32.gmra.mrb[0].mxu0 %v356
  %v449 = vpop.f32.mrb[0].mxu0
  %v450 = vadd.f32 %v347, %v449
  %v451 = vpop.f32.mrb[0].mxu0
  %452 = vmatprep.mubr.f32.mxu0 0.0
  %453 = vmatmul.mubr.f32.gmra.mrb[0].mxu0 %v359
  %v454 = vpop.f32.mrb[0].mxu0
  %v455 = vadd.f32 %v347, %v454
  %v456 = vpop.f32.mrb[0].mxu0
  %457 = vmatprep.mubr.f32.mxu0 0.0
  %458 = vmatmul.mubr.f32.gmra.mrb[0].mxu0 %v362
  %v459 = vpop.f32.mrb[0].mxu0
  %v460 = vadd.f32 %v347, %v459
  %v461 = vpop.f32.mrb[0].mxu0
  %462 = vmatprep.mubr.f32.mxu0 0.0
  %463 = vmatmul.mubr.f32.gmra.mrb[0].mxu0 %v365
  %v464 = vpop.f32.mrb[0].mxu0
  %v465 = vadd.f32 %v347, %v464
  %v466 = vpop.f32.mrb[0].mxu0
  %467 = vmatprep.mubr.f32.mxu0 0.0
  %468 = vmatmul.mubr.f32.gmra.mrb[0].mxu0 %v368
  %v469 = vpop.f32.mrb[0].mxu0
  %v470 = vadd.f32 %v347, %v469
  %v471 = vpop.f32.mrb[0].mxu0
  %472 = vmatprep.mubr.f32.mxu0 0.0
  %473 = vmatmul.mubr.f32.gmra.mrb[0].mxu0 %v371
  %v474 = vpop.f32.mrb[0].mxu0
  %v475 = vadd.f32 %v347, %v474
  %v476 = vpop.f32.mrb[0].mxu0
  %477 = vdwg.mxu0
  %vm478 = vcmask 31744
  %479 = vst.msk [vmem:[%s7] sm:$0xff] %vm478, %v440
  %480 = vst.msk [vmem:[%s7 + $0x8] sm:$0xff] %vm478, %v445
  %481 = vst.msk [vmem:[%s7 + $0x10] sm:$0xff] %vm478, %v450
  %482 = vst.msk [vmem:[%s7 + $0x18] sm:$0xff] %vm478, %v455
  %483 = vst.msk [vmem:[%s7 + $0x20] sm:$0xff] %vm478, %v460
  %484 = vst.msk [vmem:[%s7 + $0x28] sm:$0xff] %vm478, %v465
  %485 = vst.msk [vmem:[%s7 + $0x30] sm:$0xff] %vm478, %v470
  %486 = vst.msk [vmem:[%s7 + $0x38] sm:$0xff] %vm478, %v475
  // Predicated region
  $region30: #{tpu_custom_call.1} parent=0 // pred_check
    _
  $region31: #{tpu_custom_call.1} parent=0 // pred_check_branch
    %488 = sbr.rel (0) target = $region33
  $region32: #{tpu_custom_call.1} parent=0 // pred_region
    _
  $region33: #{tpu_custom_call.1} parent=0 // pred_fallthru
    _
  // Predicated region
  $region34: #{tpu_custom_call.1} parent=0 // pred_check
    _
  $region35: #{tpu_custom_call.1} parent=0 // pred_check_branch
    %490 = sbr.rel (0) target = $region37
  $region36: #{tpu_custom_call.1} parent=0 // pred_region
    _
  $region37: #{tpu_custom_call.1} parent=0 // pred_fallthru
    _

</llo_original>
